<compile_context>
chip_gen: v6e
topology: v6e:2x2x1
jax: 0.10.0
libtpu: 0.0.40
codegen_flags: <defaults>
</compile_context>

<pallas_src>
import functools
import math

import jax
import jax.numpy as jnp
from jax import lax
from jax.experimental import pallas as pl
from jax.experimental.pallas import tpu as pltpu


_STAT_LANES = 128  # lane-dense running max / denominator scratch width


# ---------------------------------------------------------------------------
# small helpers
# ---------------------------------------------------------------------------
def _seq_tile(seq_len: int, pref: int) -> int:
    """Sequence tile: preferred size, or the whole (short) sequence."""
    return pref if seq_len >= pref else seq_len


def _reduction_tile(dim: int, pref: int) -> int:
    """Lane / reduction dims: preferred tile if it divides, else the full dim
    (full-extent blocks are always legal and stay small for these dims)."""
    return pref if (dim >= pref and dim % pref == 0) else dim


def _heads_per_tile(num_heads: int, d_k: int) -> int:
    """Smallest head group whose lane width (hpt*d_k) is a multiple of 128;
    falls back to all heads (block width == full array width, always legal)."""
    for hpt in range(1, num_heads + 1):
        if num_heads % hpt == 0 and (hpt * d_k) % 128 == 0:
            return hpt
    return num_heads


def _pad_rows(arr, multiple):
    rows = arr.shape[0]
    padded = pl.cdiv(rows, multiple) * multiple
    if padded == rows:
        return arr, rows
    return jnp.pad(arr, ((0, padded - rows), (0, 0))), padded


# ---------------------------------------------------------------------------
# Fused QKV projection kernel: one x pass, three outputs, weights native (N,K)
# ---------------------------------------------------------------------------
def _qkv_proj_kernel(x_ref, wq_ref, wk_ref, wv_ref, q_ref, k_ref, v_ref,
                     acc_q, acc_k, acc_v):
    @pl.when(pl.program_id(2) == 0)
    def _():
        acc_q[...] = jnp.zeros_like(acc_q)
        acc_k[...] = jnp.zeros_like(acc_k)
        acc_v[...] = jnp.zeros_like(acc_v)

    x = x_ref[...]
    dims = (((1,), (1,)), ((), ()))  # contract shared K dim; no weight transpose
    acc_q[...] += lax.dot_general(x, wq_ref[...], dims,
                                  preferred_element_type=jnp.float32)
    acc_k[...] += lax.dot_general(x, wk_ref[...], dims,
                                  preferred_element_type=jnp.float32)
    acc_v[...] += lax.dot_general(x, wv_ref[...], dims,
                                  preferred_element_type=jnp.float32)

    @pl.when(pl.program_id(2) == pl.num_programs(2) - 1)
    def _():
        q_ref[...] = acc_q[...].astype(q_ref.dtype)
        k_ref[...] = acc_k[...].astype(k_ref.dtype)
        v_ref[...] = acc_v[...].astype(v_ref.dtype)


def fused_qkv_projection(x2d, weight_args, n_out, *, tm=256, tn=256, tk=512,
                         out_dtype=None):
    """Q/K/V = x2d @ W_slab^T for three (n_out, K) weight slabs, one x pass.

    weight_args: three (array, row_start) pairs. row_start is the element row
    offset of the slab inside the array, so the un-permuted case can pass the
    single fused weight_qkv three times (offsets 0 / n_out / 2*n_out) without
    materializing any weight slices in HBM.
    """
    M, K = x2d.shape
    out_dtype = out_dtype or x2d.dtype
    tn = _reduction_tile(n_out, tn)
    tk = _reduction_tile(K, tk)
    tm = min(tm, M)
    x_p, Mp = _pad_rows(x2d, tm)
    grid = (Mp // tm, n_out // tn, K // tk)

    in_specs = [pl.BlockSpec((tm, tk), lambda i, j, k: (i, k))]
    inputs = [x_p]
    for w_arr, row_start in weight_args:
        assert row_start % tn == 0
        off = row_start // tn
        in_specs.append(
            pl.BlockSpec((tn, tk), lambda i, j, k, off=off: (j + off, k)))
        inputs.append(w_arr)
    out_spec = pl.BlockSpec((tm, tn), lambda i, j, k: (i, j))

    itemsize = jnp.dtype(x2d.dtype).itemsize
    q, k_, v = pl.pallas_call(
        _qkv_proj_kernel,
        out_shape=tuple(jax.ShapeDtypeStruct((Mp, n_out), out_dtype)
                        for _ in range(3)),
        grid_spec=pltpu.PrefetchScalarGridSpec(
            num_scalar_prefetch=0,
            grid=grid,
            in_specs=in_specs,
            out_specs=[out_spec, out_spec, out_spec],
            scratch_shapes=[pltpu.VMEM((tm, tn), jnp.float32)
                            for _ in range(3)]),
        compiler_params=pltpu.CompilerParams(
            dimension_semantics=("parallel", "parallel", "arbitrary")),
        cost_estimate=pl.CostEstimate(
            flops=int(6 * M * K * n_out),
            transcendentals=0,
            bytes_accessed=int((M * K + 3 * K * n_out + 3 * M * n_out)
                               * itemsize)),
    )(*inputs)
    if Mp != M:
        q, k_, v = q[:M], k_[:M], v[:M]
    return q, k_, v


# ---------------------------------------------------------------------------
# Generic A @ B^T matmul (output projection) — B in native (N, K) layout
# ---------------------------------------------------------------------------
def _matmul_nt_kernel(a_ref, b_ref, o_ref, acc_ref):
    @pl.when(pl.program_id(2) == 0)
    def _():
        acc_ref[...] = jnp.zeros_like(acc_ref)

    acc_ref[...] += lax.dot_general(a_ref[...], b_ref[...],
                                    (((1,), (1,)), ((), ())),
                                    preferred_element_type=jnp.float32)

    @pl.when(pl.program_id(2) == pl.num_programs(2) - 1)
    def _():
        o_ref[...] = acc_ref[...].astype(o_ref.dtype)


def matmul_nt(a, b, *, tm=256, tn=256, tk=512, out_dtype=None):
    """C[M, N] = A[M, K] @ B[N, K]^T with an f32 VMEM accumulator."""
    M, K = a.shape
    N, K2 = b.shape
    assert K == K2, (a.shape, b.shape)
    out_dtype = out_dtype or a.dtype
    tn = _reduction_tile(N, tn)
    tk = _reduction_tile(K, tk)
    tm = min(tm, M)
    a_p, Mp = _pad_rows(a, tm)
    grid = (Mp // tm, N // tn, K // tk)
    itemsize = jnp.dtype(a.dtype).itemsize
    out = pl.pallas_call(
        _matmul_nt_kernel,
        out_shape=jax.ShapeDtypeStruct((Mp, N), out_dtype),
        grid_spec=pltpu.PrefetchScalarGridSpec(
            num_scalar_prefetch=0,
            grid=grid,
            in_specs=[pl.BlockSpec((tm, tk), lambda i, j, k: (i, k)),
                      pl.BlockSpec((tn, tk), lambda i, j, k: (j, k))],
            out_specs=pl.BlockSpec((tm, tn), lambda i, j, k: (i, j)),
            scratch_shapes=[pltpu.VMEM((tm, tn), jnp.float32)]),
        compiler_params=pltpu.CompilerParams(
            dimension_semantics=("parallel", "parallel", "arbitrary")),
        cost_estimate=pl.CostEstimate(
            flops=int(2 * M * K * N),
            transcendentals=0,
            bytes_accessed=int((M * K + K * N + M * N) * itemsize)),
    )(a_p, b)
    return out[:M] if Mp != M else out


# ---------------------------------------------------------------------------
# Causal flash-attention kernel (online softmax, per head group, fused RoPE)
# ---------------------------------------------------------------------------
def _flash_kernel(*refs, hpt, d_k, tq, tk, sm_scale, rope):
    if rope:
        (q_ref, k_ref, v_ref, sinq_ref, cosq_ref, sink_ref, cosk_ref,
         o_ref, m_scr, l_scr, acc_scr) = refs
    else:
        q_ref, k_ref, v_ref, o_ref, m_scr, l_scr, acc_scr = refs
        sinq_ref = cosq_ref = sink_ref = cosk_ref = None

    qi = pl.program_id(2)
    ki = pl.program_id(3)
    q_start = qi * tq
    k_start = ki * tk

    @pl.when(ki == 0)
    def _():
        m_scr[...] = jnp.full_like(m_scr, -jnp.inf)
        l_scr[...] = jnp.zeros_like(l_scr)
        acc_scr[...] = jnp.zeros_like(acc_scr)

    def process(apply_mask):
        cdt = q_ref.dtype
        q_blk = q_ref[0] * sm_scale        # (tq, hpt*d_k) — scale once, cheap
        k_blk = k_ref[0]                   # (tk, hpt*d_k)
        v_blk = v_ref[0]                   # (tk, hpt*d_k)
        if rope:
            sq, cq = sinq_ref[...], cosq_ref[...]   # (tq, d_k//2) f32
            sk, ck = sink_ref[...], cosk_ref[...]   # (tk, d_k//2) f32
        if apply_mask:
            q_pos = q_start + lax.broadcasted_iota(jnp.int32, (tq, tk), 0)
            k_pos = k_start + lax.broadcasted_iota(jnp.int32, (tq, tk), 1)
            visible = k_pos <= q_pos
        for h in range(hpt):
            sl = slice(h * d_k, (h + 1) * d_k)
            q_h = q_blk[:, sl]
            k_h = k_blk[:, sl]
            v_h = v_blk[:, sl]
            if rope:
                # Q/K weight rows were pre-permuted to [evens | odds] per head,
                # so RoPE is a static half-split rotation (scores are invariant
                # to that per-head feature permutation).
                d2 = d_k // 2
                qe, qo = q_h[:, :d2], q_h[:, d2:]
                q_h = jnp.concatenate([qe * cq - qo * sq, qe * sq + qo * cq],
                                      axis=-1).astype(cdt)
                ke, ko = k_h[:, :d2], k_h[:, d2:]
                k_h = jnp.concatenate([ke * ck - ko * sk, ke * sk + ko * ck],
                                      axis=-1).astype(cdt)
            s = lax.dot_general(q_h, k_h, (((1,), (1,)), ((), ())),
                                preferred_element_type=jnp.float32)  # (tq, tk)
            if apply_mask:
                s = jnp.where(visible, s, -jnp.inf)
            m_prev = m_scr[h]                                       # (tq, 128)
            m_new = jnp.maximum(m_prev, jnp.max(s, axis=-1, keepdims=True))
            alpha = jnp.exp(m_prev - m_new)
            p = jnp.exp(s - m_new[:, :1])                           # (tq, tk)
            l_scr[h] = alpha * l_scr[h] + jnp.sum(p, axis=-1, keepdims=True)
            acc_scr[h] = alpha[:, :1] * acc_scr[h] + jnp.dot(
                p.astype(v_h.dtype), v_h, preferred_element_type=jnp.float32)
            m_scr[h] = m_new

    # Blocks strictly below the causal diagonal: no masking work at all.
    @pl.when(k_start + tk - 1 <= q_start)
    def _():
        process(apply_mask=False)

    # Blocks straddling the diagonal: mask. Fully-future blocks fall through
    # both branches (and their K/V DMA was already skipped via the clamped
    # index_map in the BlockSpec).
    @pl.when(jnp.logical_and(k_start + tk - 1 > q_start,
                             k_start <= q_start + tq - 1))
    def _():
        process(apply_mask=True)

    @pl.when(ki == pl.num_programs(3) - 1)
    def _():
        parts = []
        for h in range(hpt):
            inv = pl.reciprocal(l_scr[h][:, :1], approx=True)
            parts.append((acc_scr[h] * inv).astype(o_ref.dtype))
        o_ref[0] = parts[0] if hpt == 1 else jnp.concatenate(parts, axis=-1)


def flash_causal_attention(q, k, v, *, sm_scale, num_heads, d_k, seq_tile,
                           sin=None, cos=None, out_dtype=None):
    """softmax(causal(q k^T * scale)) v for q/k/v of shape (B, S, H*d_k)."""
    B, S, F = q.shape
    assert F == num_heads * d_k
    out_dtype = out_dtype or q.dtype
    tq = tk = seq_tile
    assert S % tq == 0
    hpt = _heads_per_tile(num_heads, d_k)
    num_groups = num_heads // hpt
    width = hpt * d_k
    rope = sin is not None

    def kv_block(qi, ki):
        # Clamp fully-masked KV blocks onto the last causally-live block so the
        # pipeline re-uses the resident block instead of issuing a dead DMA.
        return jnp.minimum(ki, (qi * tq + tq - 1) // tk)

    q_spec = pl.BlockSpec((1, tq, width), lambda b, g, qi, ki: (b, qi, g))
    kv_spec = pl.BlockSpec((1, tk, width),
                           lambda b, g, qi, ki: (b, kv_block(qi, ki), g))
    in_specs = [q_spec, kv_spec, kv_spec]
    inputs = [q, k, v]
    if rope:
        d2 = d_k // 2
        rq_spec = pl.BlockSpec((tq, d2), lambda b, g, qi, ki: (qi, 0))
        rk_spec = pl.BlockSpec((tk, d2),
                               lambda b, g, qi, ki: (kv_block(qi, ki), 0))
        in_specs += [rq_spec, rq_spec, rk_spec, rk_spec]
        inputs += [sin, cos, sin, cos]
    out_spec = pl.BlockSpec((1, tq, width), lambda b, g, qi, ki: (b, qi, g))

    kernel = functools.partial(_flash_kernel, hpt=hpt, d_k=d_k, tq=tq, tk=tk,
                               sm_scale=sm_scale, rope=rope)
    itemsize = jnp.dtype(q.dtype).itemsize
    return pl.pallas_call(
        kernel,
        out_shape=jax.ShapeDtypeStruct((B, S, F), out_dtype),
        grid_spec=pltpu.PrefetchScalarGridSpec(
            num_scalar_prefetch=0,
            grid=(B, num_groups, S // tq, S // tk),
            in_specs=in_specs,
            out_specs=out_spec,
            scratch_shapes=[
                pltpu.VMEM((hpt, tq, _STAT_LANES), jnp.float32),  # running max
                pltpu.VMEM((hpt, tq, _STAT_LANES), jnp.float32),  # running denom
                pltpu.VMEM((hpt, tq, d_k), jnp.float32),          # output acc
            ]),
        compiler_params=pltpu.CompilerParams(
            dimension_semantics=("parallel", "parallel", "parallel",
                                 "arbitrary")),
        cost_estimate=pl.CostEstimate(
            flops=int(2 * B * num_heads * S * S * d_k),
            transcendentals=int(B * num_heads * S * S // 2),
            bytes_accessed=int((2 + S // tq) * B * S * F * itemsize)),
    )(*inputs)


# ---------------------------------------------------------------------------
# MultiHeadSelfAttention forward (matches the PyTorch module semantics)
# ---------------------------------------------------------------------------
def multi_head_self_attention(x, weight_qkv, weight_o, num_heads, rope=False,
                              theta=10000.0, token_positions=None,
                              compute_dtype=None, block_seq=256,
                              proj_tm=256, proj_tn=256, proj_tk=512):
    orig_dtype = x.dtype
    *lead, S, d_model = x.shape
    H = num_heads
    d_k = d_model // H
    HD = H * d_k
    B = math.prod(lead) if lead else 1
    cdt = jnp.dtype(compute_dtype) if compute_dtype is not None else orig_dtype

    x3 = x.reshape(B, S, d_model).astype(cdt)
    w_qkv = weight_qkv.astype(cdt)
    w_o = weight_o.astype(cdt)

    # Shared sequence tile; pad S so it divides evenly (padded keys are
    # causally invisible to real queries, padded rows are sliced off).
    tq = _seq_tile(S, block_seq)
    S_p = pl.cdiv(S, tq) * tq
    if S_p != S:
        x3 = jnp.pad(x3, ((0, 0), (0, S_p - S), (0, 0)))

    sin = cos = None
    if rope:
        assert d_k % 2 == 0
        if token_positions is None:
            positions = jnp.arange(S_p, dtype=jnp.float32)
        else:
            # TODO(synk): assumes token_positions of shape (S,); per-batch
            # positions would need a (B, S, d_k//2) sin/cos table.
            positions = jnp.pad(token_positions.astype(jnp.float32),
                                (0, S_p - S))
        inv_freq = 1.0 / (theta ** (jnp.arange(0, d_k, 2, dtype=jnp.float32)
                                    / d_k))
        angle = positions[:, None] * inv_freq[None, :]          # (S_p, d_k//2)
        sin, cos = jnp.sin(angle), jnp.cos(angle)
        # Pre-permute Q/K weight rows so each head's features are [evens|odds];
        # attention scores are exactly invariant to this per-head permutation.
        # TODO(synk): in a real model this permutation would be applied once
        # at parameter-load time instead of per forward call.
        perm = jnp.concatenate([jnp.arange(0, d_k, 2), jnp.arange(1, d_k, 2)])
        head_perm = (jnp.arange(H)[:, None] * d_k + perm[None, :]).reshape(-1)
        w_q = w_qkv[:HD][head_perm]
        w_k = w_qkv[HD:2 * HD][head_perm]
        weight_args = ((w_q, 0), (w_k, 0), (w_qkv, 2 * HD))
    else:
        # Single fused weight passed three times with row offsets — no weight
        # slices or transposes are materialized in HBM.
        weight_args = ((w_qkv, 0), (w_qkv, HD), (w_qkv, 2 * HD))

    # 1) fused QKV projection
    q2, k2, v2 = fused_qkv_projection(
        x3.reshape(B * S_p, d_model), weight_args, HD,
        tm=proj_tm, tn=proj_tn, tk=proj_tk, out_dtype=cdt)

    # 2) causal flash attention (head groups, clamped K/V DMA, fused RoPE)
    ctx = flash_causal_attention(
        q2.reshape(B, S_p, HD), k2.reshape(B, S_p, HD), v2.reshape(B, S_p, HD),
        sm_scale=1.0 / math.sqrt(d_k), num_heads=H, d_k=d_k, seq_tile=tq,
        sin=sin, cos=cos, out_dtype=cdt)

    # 3) output projection (weight in native (d_model, H*d_k) layout)
    out = matmul_nt(ctx.reshape(B * S_p, HD), w_o,
                    tm=proj_tm, tn=proj_tn, tk=proj_tk, out_dtype=orig_dtype)
    out = out.reshape(B, S_p, d_model)[:, :S]
    return out.reshape(*lead, S, d_model)


# ---------------------------------------------------------------------------
# Pure-JAX reference (mirrors the PyTorch module exactly)
# ---------------------------------------------------------------------------
def _reference_rope(x, positions, theta, d_k):
    pos = positions.astype(jnp.float32)
    dim = jnp.arange(0, d_k, 2, dtype=jnp.float32)
    angle = pos[:, None] / theta ** (dim / d_k)
    sin, cos = jnp.sin(angle), jnp.cos(angle)
    x_even = x[..., 0::2]
    x_odd = x[..., 1::2]
    rot_even = x_even * cos - x_odd * sin
    rot_odd = x_even * sin + x_odd * cos
    return jnp.stack((rot_even, rot_odd), axis=-1).reshape(x.shape)


def reference_mhsa(x, weight_qkv, weight_o, num_heads, rope=False,
                   theta=10000.0, token_positions=None):
    *lead, S, d_model = x.shape
    H = num_heads
    d_k = d_model // H
    Wx = jnp.einsum('...sm,km->...sk', x, weight_qkv)
    Wx = jnp.moveaxis(Wx.reshape(*lead, S, 3 * H, d_k), -2, -3)
    q, k, v = Wx[..., :H, :, :], Wx[..., H:2 * H, :, :], Wx[..., 2 * H:, :, :]
    if rope:
        if token_positions is None:
            token_positions = jnp.arange(S, dtype=jnp.int32)
        q = _reference_rope(q, token_positions, theta, d_k)
        k = _reference_rope(k, token_positions, theta, d_k)
    scores = jnp.einsum('...qd,...kd->...qk', q, k) / math.sqrt(d_k)
    mask = jnp.tril(jnp.ones((S, S), dtype=bool))
    scores = jnp.where(mask, scores, -jnp.inf)
    p = jax.nn.softmax(scores, axis=-1)
    ctx = jnp.einsum('...qk,...kd->...qd', p, v)
    ctx = jnp.moveaxis(ctx, -3, -2).reshape(*lead, S, H * d_k)
    return jnp.einsum('...sf,mf->...sm', ctx, weight_o)


if __name__ == "__main__":
    def run_case(batch, seq, d_model, heads, rope_flag, *, block_seq=256,
                 compute_dtype=None, rtol=2e-2, atol=2e-2):
        key = jax.random.PRNGKey(0)
        kx, kq, ko = jax.random.split(key, 3)
        d_k = d_model // heads
        x = jax.random.normal(kx, (batch, seq, d_model), dtype=jnp.float32)
        w_qkv = jax.random.normal(kq, (heads * d_k * 3, d_model),
                                  dtype=jnp.float32) * (d_model ** -0.5)
        w_o = jax.random.normal(ko, (d_model, heads * d_k),
                                dtype=jnp.float32) * ((heads * d_k) ** -0.5)
        out = multi_head_self_attention(
            x, w_qkv, w_o, heads, rope=rope_flag, theta=10000.0,
            block_seq=block_seq, compute_dtype=compute_dtype)
        out = jax.block_until_ready(out)
        assert out.shape == (batch, seq, d_model)
        assert out.dtype == x.dtype
        ref = reference_mhsa(x, w_qkv, w_o, heads, rope=rope_flag, theta=10000.0)
        err = float(jnp.max(jnp.abs(out - ref)))
        assert jnp.allclose(out, ref, rtol=rtol, atol=atol), \
            ((batch, seq, d_model, heads, rope_flag), err)

    # Small shapes consistent with the module (single-block regime).
    run_case(2, 8, 64, 4, False)
    run_case(2, 8, 64, 4, True)
    # Tiled regime: multiple q/k blocks, multiple head groups, causal DMA/skip
    # and the multi-block online-softmax recurrence all exercised.
    run_case(2, 256, 256, 4, False, block_seq=128)
    run_case(2, 256, 256, 4, True, block_seq=128)
    # Non-divisible sequence length (exercises the padding path).
    run_case(2, 200, 256, 4, False, block_seq=128)
    # bf16 MXU operands with f32 accumulation (v6e/v7x fast path).
    run_case(2, 256, 256, 4, False, block_seq=128,
             compute_dtype=jnp.bfloat16, rtol=1e-1, atol=1e-1)

    print("KERNEL_OK")
</pallas_src>

<mosaic_0001>
module attributes {stable_mosaic.version = 11 : i64} {
  func.func @_qkv_proj_kernel(%arg0: i32, %arg1: i32, %arg2: i32, %arg3: memref<16x64xf32, #tpu.memory_space<vmem>>, %arg4: memref<64x64xf32, #tpu.memory_space<vmem>>, %arg5: memref<64x64xf32, #tpu.memory_space<vmem>>, %arg6: memref<64x64xf32, #tpu.memory_space<vmem>>, %arg7: memref<16x64xf32, #tpu.memory_space<vmem>>, %arg8: memref<16x64xf32, #tpu.memory_space<vmem>>, %arg9: memref<16x64xf32, #tpu.memory_space<vmem>>, %arg10: memref<16x64xf32, #tpu.memory_space<vmem>>, %arg11: memref<16x64xf32, #tpu.memory_space<vmem>>, %arg12: memref<16x64xf32, #tpu.memory_space<vmem>>) attributes {dimension_semantics = [#tpu.dimension_semantics<parallel>, #tpu.dimension_semantics<parallel>, #tpu.dimension_semantics<arbitrary>], iteration_bounds = array<i64: 1, 1, 1>, scalar_prefetch = 0 : i64, scratch_operands = 3 : i64, tpu.core_type = #tpu.core_type<tc>, window_params = [{transform_indices = @transform_0, window_bounds = array<i64: 16, 64>}, {transform_indices = @transform_1, window_bounds = array<i64: 64, 64>}, {transform_indices = @transform_2, window_bounds = array<i64: 64, 64>}, {transform_indices = @transform_3, window_bounds = array<i64: 64, 64>}, {transform_indices = @transform_4, window_bounds = array<i64: 16, 64>}, {transform_indices = @transform_5, window_bounds = array<i64: 16, 64>}, {transform_indices = @transform_6, window_bounds = array<i64: 16, 64>}]} {
    %c0_i32 = arith.constant 0 : i32
    %0 = arith.cmpi eq, %arg2, %c0_i32 : i32
    %1 = arith.extui %0 : i1 to i32
    %c0_i32_0 = arith.constant 0 : i32
    %2 = arith.cmpi ne, %1, %c0_i32_0 : i32
    scf.if %2 {
      %cst_24 = arith.constant 0.000000e+00 : f32
      %22 = vector.broadcast %cst_24 : f32 to vector<16x64xf32>
      %c0_25 = arith.constant 0 : index
      %c0_26 = arith.constant 0 : index
      %23 = vector.load %arg10[%c0_25, %c0_26] : memref<16x64xf32, #tpu.memory_space<vmem>>, vector<16x64xf32>
      tpu.vector_store %arg10[%c0_25, %c0_26], %22 {strides = array<i32>} : memref<16x64xf32, #tpu.memory_space<vmem>>, vector<16x64xf32>,
      %cst_27 = arith.constant 0.000000e+00 : f32
      %24 = vector.broadcast %cst_27 : f32 to vector<16x64xf32>
      %c0_28 = arith.constant 0 : index
      %c0_29 = arith.constant 0 : index
      %25 = vector.load %arg11[%c0_28, %c0_29] : memref<16x64xf32, #tpu.memory_space<vmem>>, vector<16x64xf32>
      tpu.vector_store %arg11[%c0_28, %c0_29], %24 {strides = array<i32>} : memref<16x64xf32, #tpu.memory_space<vmem>>, vector<16x64xf32>,
      %cst_30 = arith.constant 0.000000e+00 : f32
      %26 = vector.broadcast %cst_30 : f32 to vector<16x64xf32>
      %c0_31 = arith.constant 0 : index
      %c0_32 = arith.constant 0 : index
      %27 = vector.load %arg12[%c0_31, %c0_32] : memref<16x64xf32, #tpu.memory_space<vmem>>, vector<16x64xf32>
      tpu.vector_store %arg12[%c0_31, %c0_32], %26 {strides = array<i32>} : memref<16x64xf32, #tpu.memory_space<vmem>>, vector<16x64xf32>,
    } else {
    }
    %c0 = arith.constant 0 : index
    %c0_1 = arith.constant 0 : index
    %3 = vector.load %arg3[%c0, %c0_1] : memref<16x64xf32, #tpu.memory_space<vmem>>, vector<16x64xf32>
    %c0_2 = arith.constant 0 : index
    %c0_3 = arith.constant 0 : index
    %4 = vector.load %arg10[%c0_2, %c0_3] : memref<16x64xf32, #tpu.memory_space<vmem>>, vector<16x64xf32>
    %c0_4 = arith.constant 0 : index
    %c0_5 = arith.constant 0 : index
    %5 = vector.load %arg4[%c0_4, %c0_5] : memref<64x64xf32, #tpu.memory_space<vmem>>, vector<64x64xf32>
    %cst = arith.constant dense<0.000000e+00> : vector<16x64xf32>
    %6 = tpu.matmul %3, %5, %cst {dimension_numbers = #tpu.dot_dimension_numbers<[1], [1], [0], [0], [0, 0, 1, 0], [], []>} : vector<16x64xf32>, vector<64x64xf32>, vector<16x64xf32> -> vector<16x64xf32>
    %7 = arith.addf %4, %6 : vector<16x64xf32>
    %c0_6 = arith.constant 0 : index
    %c0_7 = arith.constant 0 : index
    %8 = vector.load %arg10[%c0_6, %c0_7] : memref<16x64xf32, #tpu.memory_space<vmem>>, vector<16x64xf32>
    tpu.vector_store %arg10[%c0_6, %c0_7], %7 {strides = array<i32>} : memref<16x64xf32, #tpu.memory_space<vmem>>, vector<16x64xf32>,
    %c0_8 = arith.constant 0 : index
    %c0_9 = arith.constant 0 : index
    %9 = vector.load %arg11[%c0_8, %c0_9] : memref<16x64xf32, #tpu.memory_space<vmem>>, vector<16x64xf32>
    %c0_10 = arith.constant 0 : index
    %c0_11 = arith.constant 0 : index
    %10 = vector.load %arg5[%c0_10, %c0_11] : memref<64x64xf32, #tpu.memory_space<vmem>>, vector<64x64xf32>
    %cst_12 = arith.constant dense<0.000000e+00> : vector<16x64xf32>
    %11 = tpu.matmul %3, %10, %cst_12 {dimension_numbers = #tpu.dot_dimension_numbers<[1], [1], [0], [0], [0, 0, 1, 0], [], []>} : vector<16x64xf32>, vector<64x64xf32>, vector<16x64xf32> -> vector<16x64xf32>
    %12 = arith.addf %9, %11 : vector<16x64xf32>
    %c0_13 = arith.constant 0 : index
    %c0_14 = arith.constant 0 : index
    %13 = vector.load %arg11[%c0_13, %c0_14] : memref<16x64xf32, #tpu.memory_space<vmem>>, vector<16x64xf32>
    tpu.vector_store %arg11[%c0_13, %c0_14], %12 {strides = array<i32>} : memref<16x64xf32, #tpu.memory_space<vmem>>, vector<16x64xf32>,
    %c0_15 = arith.constant 0 : index
    %c0_16 = arith.constant 0 : index
    %14 = vector.load %arg12[%c0_15, %c0_16] : memref<16x64xf32, #tpu.memory_space<vmem>>, vector<16x64xf32>
    %c0_17 = arith.constant 0 : index
    %c0_18 = arith.constant 0 : index
    %15 = vector.load %arg6[%c0_17, %c0_18] : memref<64x64xf32, #tpu.memory_space<vmem>>, vector<64x64xf32>
    %cst_19 = arith.constant dense<0.000000e+00> : vector<16x64xf32>
    %16 = tpu.matmul %3, %15, %cst_19 {dimension_numbers = #tpu.dot_dimension_numbers<[1], [1], [0], [0], [0, 0, 1, 0], [], []>} : vector<16x64xf32>, vector<64x64xf32>, vector<16x64xf32> -> vector<16x64xf32>
    %17 = arith.addf %14, %16 : vector<16x64xf32>
    %c0_20 = arith.constant 0 : index
    %c0_21 = arith.constant 0 : index
    %18 = vector.load %arg12[%c0_20, %c0_21] : memref<16x64xf32, #tpu.memory_space<vmem>>, vector<16x64xf32>
    tpu.vector_store %arg12[%c0_20, %c0_21], %17 {strides = array<i32>} : memref<16x64xf32, #tpu.memory_space<vmem>>, vector<16x64xf32>,
    %c0_i32_22 = arith.constant 0 : i32
    %19 = arith.cmpi eq, %arg2, %c0_i32_22 : i32
    %20 = arith.extui %19 : i1 to i32
    %c0_i32_23 = arith.constant 0 : i32
    %21 = arith.cmpi ne, %20, %c0_i32_23 : i32
    scf.if %21 {
      %c0_24 = arith.constant 0 : index
      %c0_25 = arith.constant 0 : index
      %22 = vector.load %arg10[%c0_24, %c0_25] : memref<16x64xf32, #tpu.memory_space<vmem>>, vector<16x64xf32>
      %c0_26 = arith.constant 0 : index
      %c0_27 = arith.constant 0 : index
      %23 = vector.load %arg7[%c0_26, %c0_27] : memref<16x64xf32, #tpu.memory_space<vmem>>, vector<16x64xf32>
      tpu.vector_store %arg7[%c0_26, %c0_27], %22 {strides = array<i32>} : memref<16x64xf32, #tpu.memory_space<vmem>>, vector<16x64xf32>,
      %c0_28 = arith.constant 0 : index
      %c0_29 = arith.constant 0 : index
      %24 = vector.load %arg11[%c0_28, %c0_29] : memref<16x64xf32, #tpu.memory_space<vmem>>, vector<16x64xf32>
      %c0_30 = arith.constant 0 : index
      %c0_31 = arith.constant 0 : index
      %25 = vector.load %arg8[%c0_30, %c0_31] : memref<16x64xf32, #tpu.memory_space<vmem>>, vector<16x64xf32>
      tpu.vector_store %arg8[%c0_30, %c0_31], %24 {strides = array<i32>} : memref<16x64xf32, #tpu.memory_space<vmem>>, vector<16x64xf32>,
      %c0_32 = arith.constant 0 : index
      %c0_33 = arith.constant 0 : index
      %26 = vector.load %arg12[%c0_32, %c0_33] : memref<16x64xf32, #tpu.memory_space<vmem>>, vector<16x64xf32>
      %c0_34 = arith.constant 0 : index
      %c0_35 = arith.constant 0 : index
      %27 = vector.load %arg9[%c0_34, %c0_35] : memref<16x64xf32, #tpu.memory_space<vmem>>, vector<16x64xf32>
      tpu.vector_store %arg9[%c0_34, %c0_35], %26 {strides = array<i32>} : memref<16x64xf32, #tpu.memory_space<vmem>>, vector<16x64xf32>,
    } else {
    }
    return
  }
  func.func @transform_0(%arg0: i32, %arg1: i32, %arg2: i32) -> (i32, i32) {
    %c0_i32 = arith.constant 0 : i32
    return %arg0, %arg2 : i32, i32
  }
  func.func @transform_1(%arg0: i32, %arg1: i32, %arg2: i32) -> (i32, i32) {
    %c0_i32 = arith.constant 0 : i32
    %0 = arith.addi %arg1, %c0_i32 : i32
    %c0_i32_0 = arith.constant 0 : i32
    return %0, %arg2 : i32, i32
  }
  func.func @transform_2(%arg0: i32, %arg1: i32, %arg2: i32) -> (i32, i32) {
    %c1_i32 = arith.constant 1 : i32
    %0 = arith.addi %arg1, %c1_i32 : i32
    %c0_i32 = arith.constant 0 : i32
    return %0, %arg2 : i32, i32
  }
  func.func @transform_3(%arg0: i32, %arg1: i32, %arg2: i32) -> (i32, i32) {
    %c2_i32 = arith.constant 2 : i32
    %0 = arith.addi %arg1, %c2_i32 : i32
    %c0_i32 = arith.constant 0 : i32
    return %0, %arg2 : i32, i32
  }
  func.func @transform_4(%arg0: i32, %arg1: i32, %arg2: i32) -> (i32, i32) {
    %c0_i32 = arith.constant 0 : i32
    return %arg0, %arg1 : i32, i32
  }
  func.func @transform_5(%arg0: i32, %arg1: i32, %arg2: i32) -> (i32, i32) {
    %c0_i32 = arith.constant 0 : i32
    return %arg0, %arg1 : i32, i32
  }
  func.func @transform_6(%arg0: i32, %arg1: i32, %arg2: i32) -> (i32, i32) {
    %c0_i32 = arith.constant 0 : i32
    return %arg0, %arg1 : i32, i32
  }
}

</mosaic_0001>

<llo_original>
// kernel: tpu_custom_call.1
$region0: #{tpu_custom_call.1}
  #allocation0 [shape = 'u32[]', space=smem, size = 0x4, offset = 0x4, fixed_abs, tag = 'smem constant byte address 0x4 - core index']
  #allocation1 [shape = 'u32[144,128]{1,0:T(1,128)}', space=vmem, size = 0x12000, scoped, tag = 'internal scratch']
  #allocation2 [shape = 'f32[16,64]{1,0:T(8,128)}', space=vmem, size = 0x2000, scoped, tag = 'scratch operand']
  #allocation3 [shape = 'f32[16,64]{1,0:T(8,128)}', space=vmem, size = 0x2000, scoped, tag = 'scratch operand']
  #allocation4 [shape = 'f32[16,64]{1,0:T(8,128)}', space=vmem, size = 0x2000, scoped, tag = 'scratch operand']
  %s0 = inlined_call_operand.vmem [shape: f32[16,64], index: 0, kind: input, shape index: {}]
  %s1 = inlined_call_operand.vmem [shape: f32[192,64], index: 1, kind: input, shape index: {}]
  %s2 = inlined_call_operand.vmem [shape: f32[192,64], index: 2, kind: input, shape index: {}]
  %s3 = inlined_call_operand.vmem [shape: f32[192,64], index: 3, kind: input, shape index: {}]
  %s4 = inlined_call_operand.hbm [shape: f32[16,64], index: 4, kind: output, shape index: {0}]
  %s5 = inlined_call_operand.hbm [shape: f32[16,64], index: 5, kind: output, shape index: {1}]
  %s6 = inlined_call_operand.hbm [shape: f32[16,64], index: 6, kind: output, shape index: {2}]
  %7 = xla_tuple %s4, %s5, %s6
  %s8 = sld [smem:[#allocation0]]
  $region50: #{tpu_custom_call.1} parent=0
    _
  %s10 = ssub.s32 1, %s8
  %s11 = scalar_select 0, %s10, %s8
  $region1: #{tpu_custom_call.1} parent=0
    #allocation5 [shape = 'u8[8192]{0}', space=vmem, size = 0x2000, scoped, tag = 'output window, operand 0, single buffered']
    #allocation6 [shape = 's32[1]{0}', space=sflag, size = 0x4, scoped, tag = 'scoped memory for tpu_custom_call.1']
    #allocation7 [shape = 'u8[8192]{0}', space=vmem, size = 0x2000, scoped, tag = 'output window, operand 1, single buffered']
    #allocation8 [shape = 's32[1]{0}', space=sflag, size = 0x4, scoped, tag = 'scoped memory for tpu_custom_call.1']
    #allocation9 [shape = 'u8[8192]{0}', space=vmem, size = 0x2000, scoped, tag = 'output window, operand 2, single buffered']
    %12 = vsyncpa [#allocation6], 0
    %13 = vsyncpa [#allocation8], 0
    // Predicated region
    $region2: #{tpu_custom_call.1} parent=1 // pred_check
      _
    $region3: #{tpu_custom_call.1} parent=1 // pred_check_branch
      %15 = sbr.rel (0) target = $region5
    $region4: #{tpu_custom_call.1} parent=1 // pred_region
      _
    $region5: #{tpu_custom_call.1} parent=1 // pred_fallthru
      _
    // Predicated region
    $region6: #{tpu_custom_call.1} parent=1 // pred_check
      _
    $region7: #{tpu_custom_call.1} parent=1 // pred_check_branch
      %17 = sbr.rel (0) target = $region9
    $region8: #{tpu_custom_call.1} parent=1 // pred_region
      _
    $region9: #{tpu_custom_call.1} parent=1 // pred_fallthru
      _
    // Predicated region
    $region10: #{tpu_custom_call.1} parent=1 // pred_check
      _
    $region11: #{tpu_custom_call.1} parent=1 // pred_check_branch
      %19 = sbr.rel (0) target = $region13
    $region12: #{tpu_custom_call.1} parent=1 // pred_region
      %s20 = sadd.s32 0, 1
      %s21 = smul.u32 8, %s20
      %p22 = scmp.lt.s32.totalorder %s21, 23
      %s23 = scalar_select %p22, %s21, 23
      %s24 = smul.addr %s23, 8
      %s25 = scalar_lea.vmem %s2, %s24
      %s26 = sadd.s32 0, 1
      %s27 = smul.u32 8, %s26
    $region13: #{tpu_custom_call.1} parent=1 // pred_fallthru
      _
    // Predicated region
    $region14: #{tpu_custom_call.1} parent=1 // pred_check
      _
    $region15: #{tpu_custom_call.1} parent=1 // pred_check_branch
      %29 = sbr.rel (0) target = $region17
    $region16: #{tpu_custom_call.1} parent=1 // pred_region
      %s30 = sadd.s32 0, 2
      %s31 = smul.u32 8, %s30
      %p32 = scmp.lt.s32.totalorder %s31, 23
      %s33 = scalar_select %p32, %s31, 23
      %s34 = smul.addr %s33, 8
      %s35 = scalar_lea.vmem %s3, %s34
      %s36 = sadd.s32 0, 2
      %s37 = smul.u32 8, %s36
    $region17: #{tpu_custom_call.1} parent=1 // pred_fallthru
      _
    %s38 = sadd.s32 0, 1
    %s39 = smul.u32 8, %s38
    %p40 = scmp.lt.s32.totalorder %s39, 23
    %s41 = scalar_select %p40, %s39, 23
    %s42 = smul.addr %s41, 8
    %s43 = scalar_lea.vmem %s2, %s42
    %s44 = sadd.s32 0, 2
    %s45 = smul.u32 8, %s44
    %p46 = scmp.lt.s32.totalorder %s45, 23
    %s47 = scalar_select %p46, %s45, 23
    %s48 = smul.addr %s47, 8
    %s49 = scalar_lea.vmem %s3, %s48
    %s50 = sadd.s32 0, 1
    %s51 = smul.u32 8, %s50
    %p52 = scmp.lt.s32.totalorder %s51, 23
    %s53 = scalar_select %p52, %s51, 23
    %s54 = smul.addr %s53, 8
    %s55 = scalar_lea.vmem %s2, %s54
    %s56 = sadd.s32 0, 1
    %s57 = smul.u32 8, %s56
    %s58 = sadd.s32 0, 2
    %s59 = smul.u32 8, %s58
    %p60 = scmp.lt.s32.totalorder %s59, 23
    %s61 = scalar_select %p60, %s59, 23
    %s62 = smul.addr %s61, 8
    %s63 = scalar_lea.vmem %s3, %s62
    %s64 = sadd.s32 0, 2
    %s65 = smul.u32 8, %s64
    %p66 = scmp.eq.s32.totalorder 0, 0
    // Predicated region
    $region18: #{tpu_custom_call.1} parent=1 // pred_check
      %p67 = pneg %p66
    $region19: #{tpu_custom_call.1} parent=1 // pred_check_branch
      %69 = sbr.rel (%p67) target = $region21
    $region20: #{tpu_custom_call.1} parent=1 // pred_region
      %vm70 = vcmask 523264
      %71 = vst.msk [vmem:[#allocation2] sm:$0xff] %vm70, 0.0
      %72 = vst.msk [vmem:[#allocation2 + $0x8] sm:$0xff] %vm70, 0.0
      %73 = vst.msk [vmem:[#allocation3] sm:$0xff] %vm70, 0.0
      %74 = vst.msk [vmem:[#allocation3 + $0x8] sm:$0xff] %vm70, 0.0
      %75 = vst.msk [vmem:[#allocation4] sm:$0xff] %vm70, 0.0
      %76 = vst.msk [vmem:[#allocation4 + $0x8] sm:$0xff] %vm70, 0.0
    $region21: #{tpu_custom_call.1} parent=1 // pred_fallthru
      _
    %v77 = vld [vmem:[%s0] sm:$0xff]
    %v78 = vld [vmem:[%s0 + $0x8] sm:$0xff]
    %v79 = vld [vmem:[#allocation2] sm:$0xff]
    %v80 = vld [vmem:[#allocation2 + $0x8] sm:$0xff]
    %v81 = vld [vmem:[%s1] sm:$0xff]
    %v82 = vld [vmem:[%s1 + $0x8] sm:$0xff]
    %v83 = vld [vmem:[%s1 + $0x10] sm:$0xff]
    %v84 = vld [vmem:[%s1 + $0x18] sm:$0xff]
    %v85 = vld [vmem:[%s1 + $0x20] sm:$0xff]
    %v86 = vld [vmem:[%s1 + $0x28] sm:$0xff]
    %v87 = vld [vmem:[%s1 + $0x30] sm:$0xff]
    %v88 = vld [vmem:[%s1 + $0x38] sm:$0xff]
    %vm89 = vcmask 523264
    %v91 = vsel %vm89, %v77, 0
    %v94 = vsel %vm89, %v78, 0
    %v97 = vsel %vm89, %v81, 0
    %v100 = vsel %vm89, %v82, 0
    %v103 = vsel %vm89, %v83, 0
    %v106 = vsel %vm89, %v84, 0
    %v109 = vsel %vm89, %v85, 0
    %v112 = vsel %vm89, %v86, 0
    %v115 = vsel %vm89, %v87, 0
    %v118 = vsel %vm89, %v88, 0
    %120 = vmatprep.subr.mxu0 0.0
    %121 = vmatpush1.xpose.msra.mxu0 0.0
    %122 = vmatprep.subr.mxu0 0.0
    %123 = vmatpush1.xpose.msra.mxu0 0.0
    %124 = vmatprep.subr.mxu0 0.0
    %125 = vmatpush1.xpose.msra.mxu0 0.0
    %126 = vmatprep.subr.mxu0 0.0
    %127 = vmatpush1.xpose.msra.mxu0 0.0
    %128 = vmatprep.subr.mxu0 0.0
    %129 = vmatpush1.xpose.msra.mxu0 0.0
    %130 = vmatprep.subr.mxu0 0.0
    %131 = vmatpush1.xpose.msra.mxu0 0.0
    %132 = vmatprep.subr.mxu0 0.0
    %133 = vmatpush1.xpose.msra.mxu0 0.0
    %134 = vmatprep.subr.mxu0 0.0
    %135 = vmatpush1.xpose.msra.mxu0 0.0
    %136 = vmatprep.subr.mxu0 0.0
    %137 = vmatpush1.xpose.msra.mxu0 %v118
    %138 = vmatprep.subr.mxu0 0.0
    %139 = vmatpush1.xpose.msra.mxu0 %v115
    %140 = vmatprep.subr.mxu0 0.0
    %141 = vmatpush1.xpose.msra.mxu0 %v112
    %142 = vmatprep.subr.mxu0 0.0
    %143 = vmatpush1.xpose.msra.mxu0 %v109
    %144 = vmatprep.subr.mxu0 0.0
    %145 = vmatpush1.xpose.msra.mxu0 %v106
    %146 = vmatprep.subr.mxu0 0.0
    %147 = vmatpush1.xpose.msra.mxu0 %v103
    %148 = vmatprep.subr.mxu0 0.0
    %149 = vmatpush1.xpose.msra.mxu0 %v100
    %150 = vmatprep.subr.mxu0 0.0
    %151 = vmatpush1.xpose.msra.mxu0 %v97
    %152 = vmatprep.subr.mxu0 0.0
    %153 = vmatpush2.xpose.msra.mxu0 0.0
    %154 = vmatprep.subr.mxu0 0.0
    %155 = vmatpush2.xpose.msra.mxu0 0.0
    %156 = vmatprep.subr.mxu0 0.0
    %157 = vmatpush2.xpose.msra.mxu0 0.0
    %158 = vmatprep.subr.mxu0 0.0
    %159 = vmatpush2.xpose.msra.mxu0 0.0
    %160 = vmatprep.subr.mxu0 0.0
    %161 = vmatpush2.xpose.msra.mxu0 0.0
    %162 = vmatprep.subr.mxu0 0.0
    %163 = vmatpush2.xpose.msra.mxu0 0.0
    %164 = vmatprep.subr.mxu0 0.0
    %165 = vmatpush2.xpose.msra.mxu0 0.0
    %166 = vmatprep.subr.mxu0 0.0
    %167 = vmatpush2.xpose.msra.mxu0 0.0
    %168 = vmatprep.subr.mxu0 0.0
    %169 = vmatpush2.xpose.msra.mxu0 0.0
    %170 = vmatprep.subr.mxu0 0.0
    %171 = vmatpush2.xpose.msra.mxu0 0.0
    %172 = vmatprep.subr.mxu0 0.0
    %173 = vmatpush2.xpose.msra.mxu0 0.0
    %174 = vmatprep.subr.mxu0 0.0
    %175 = vmatpush2.xpose.msra.mxu0 0.0
    %176 = vmatprep.subr.mxu0 0.0
    %177 = vmatpush2.xpose.msra.mxu0 0.0
    %178 = vmatprep.subr.mxu0 0.0
    %179 = vmatpush2.xpose.msra.mxu0 0.0
    %180 = vmatprep.subr.mxu0 0.0
    %181 = vmatpush2.xpose.msra.mxu0 0.0
    %182 = vmatprep.subr.mxu0 0.0
    %183 = vmatpush2.xpose.msra.mxu0 0.0
    %184 = vmatprep.mubr.f32.mxu0 0.0
    %185 = vmatmul.mubr.f32.gmra.mxu0 %v91
    %v186 = vpop.f32.mrf.mxu0
    %v187 = vadd.f32 0.0, %v186
    %v188 = vpop.f32.mrf.mxu0
    %189 = vmatprep.mubr.f32.mxu0 0.0
    %190 = vmatmul.mubr.f32.gmra.mxu0 %v94
    %v191 = vpop.f32.mrf.mxu0
    %v192 = vadd.f32 0.0, %v191
    %v193 = vpop.f32.mrf.mxu0
    %194 = vdwg.mxu0
    %v195 = vadd.f32 %v79, %v187
    %v196 = vadd.f32 %v80, %v192
    %197 = vst.msk [vmem:[#allocation2] sm:$0xff] %vm89, %v195
    %198 = vst.msk [vmem:[#allocation2 + $0x8] sm:$0xff] %vm89, %v196
    %v199 = vld [vmem:[#allocation3] sm:$0xff]
    %v200 = vld [vmem:[#allocation3 + $0x8] sm:$0xff]
    %v201 = vld [vmem:[%s55] sm:$0xff]
    %v202 = vld [vmem:[%s55 + $0x8] sm:$0xff]
    %v203 = vld [vmem:[%s55 + $0x10] sm:$0xff]
    %v204 = vld [vmem:[%s55 + $0x18] sm:$0xff]
    %v205 = vld [vmem:[%s55 + $0x20] sm:$0xff]
    %v206 = vld [vmem:[%s55 + $0x28] sm:$0xff]
    %v207 = vld [vmem:[%s55 + $0x30] sm:$0xff]
    %v208 = vld [vmem:[%s55 + $0x38] sm:$0xff]
    %v210 = vsel %vm89, %v201, 0
    %v213 = vsel %vm89, %v202, 0
    %v216 = vsel %vm89, %v203, 0
    %v219 = vsel %vm89, %v204, 0
    %v222 = vsel %vm89, %v205, 0
    %v225 = vsel %vm89, %v206, 0
    %v228 = vsel %vm89, %v207, 0
    %v231 = vsel %vm89, %v208, 0
    %233 = vmatprep.subr.mxu0 0.0
    %234 = vmatpush1.xpose.msra.mxu0 0.0
    %235 = vmatprep.subr.mxu0 0.0
    %236 = vmatpush1.xpose.msra.mxu0 0.0
    %237 = vmatprep.subr.mxu0 0.0
    %238 = vmatpush1.xpose.msra.mxu0 0.0
    %239 = vmatprep.subr.mxu0 0.0
    %240 = vmatpush1.xpose.msra.mxu0 0.0
    %241 = vmatprep.subr.mxu0 0.0
    %242 = vmatpush1.xpose.msra.mxu0 0.0
    %243 = vmatprep.subr.mxu0 0.0
    %244 = vmatpush1.xpose.msra.mxu0 0.0
    %245 = vmatprep.subr.mxu0 0.0
    %246 = vmatpush1.xpose.msra.mxu0 0.0
    %247 = vmatprep.subr.mxu0 0.0
    %248 = vmatpush1.xpose.msra.mxu0 0.0
    %249 = vmatprep.subr.mxu0 0.0
    %250 = vmatpush1.xpose.msra.mxu0 %v231
    %251 = vmatprep.subr.mxu0 0.0
    %252 = vmatpush1.xpose.msra.mxu0 %v228
    %253 = vmatprep.subr.mxu0 0.0
    %254 = vmatpush1.xpose.msra.mxu0 %v225
    %255 = vmatprep.subr.mxu0 0.0
    %256 = vmatpush1.xpose.msra.mxu0 %v222
    %257 = vmatprep.subr.mxu0 0.0
    %258 = vmatpush1.xpose.msra.mxu0 %v219
    %259 = vmatprep.subr.mxu0 0.0
    %260 = vmatpush1.xpose.msra.mxu0 %v216
    %261 = vmatprep.subr.mxu0 0.0
    %262 = vmatpush1.xpose.msra.mxu0 %v213
    %263 = vmatprep.subr.mxu0 0.0
    %264 = vmatpush1.xpose.msra.mxu0 %v210
    %265 = vmatprep.subr.mxu0 0.0
    %266 = vmatpush2.xpose.msra.mxu0 0.0
    %267 = vmatprep.subr.mxu0 0.0
    %268 = vmatpush2.xpose.msra.mxu0 0.0
    %269 = vmatprep.subr.mxu0 0.0
    %270 = vmatpush2.xpose.msra.mxu0 0.0
    %271 = vmatprep.subr.mxu0 0.0
    %272 = vmatpush2.xpose.msra.mxu0 0.0
    %273 = vmatprep.subr.mxu0 0.0
    %274 = vmatpush2.xpose.msra.mxu0 0.0
    %275 = vmatprep.subr.mxu0 0.0
    %276 = vmatpush2.xpose.msra.mxu0 0.0
    %277 = vmatprep.subr.mxu0 0.0
    %278 = vmatpush2.xpose.msra.mxu0 0.0
    %279 = vmatprep.subr.mxu0 0.0
    %280 = vmatpush2.xpose.msra.mxu0 0.0
    %281 = vmatprep.subr.mxu0 0.0
    %282 = vmatpush2.xpose.msra.mxu0 0.0
    %283 = vmatprep.subr.mxu0 0.0
    %284 = vmatpush2.xpose.msra.mxu0 0.0
    %285 = vmatprep.subr.mxu0 0.0
    %286 = vmatpush2.xpose.msra.mxu0 0.0
    %287 = vmatprep.subr.mxu0 0.0
    %288 = vmatpush2.xpose.msra.mxu0 0.0
    %289 = vmatprep.subr.mxu0 0.0
    %290 = vmatpush2.xpose.msra.mxu0 0.0
    %291 = vmatprep.subr.mxu0 0.0
    %292 = vmatpush2.xpose.msra.mxu0 0.0
    %293 = vmatprep.subr.mxu0 0.0
    %294 = vmatpush2.xpose.msra.mxu0 0.0
    %295 = vmatprep.subr.mxu0 0.0
    %296 = vmatpush2.xpose.msra.mxu0 0.0
    %297 = vmatprep.mubr.f32.mxu0 0.0
    %298 = vmatmul.mubr.f32.gmra.mxu0 %v91
    %v299 = vpop.f32.mrf.mxu0
    %v300 = vadd.f32 0.0, %v299
    %v301 = vpop.f32.mrf.mxu0
    %302 = vmatprep.mubr.f32.mxu0 0.0
    %303 = vmatmul.mubr.f32.gmra.mxu0 %v94
    %v304 = vpop.f32.mrf.mxu0
    %v305 = vadd.f32 0.0, %v304
    %v306 = vpop.f32.mrf.mxu0
    %307 = vdwg.mxu0
    %v308 = vadd.f32 %v199, %v300
    %v309 = vadd.f32 %v200, %v305
    %310 = vst.msk [vmem:[#allocation3] sm:$0xff] %vm89, %v308
    %311 = vst.msk [vmem:[#allocation3 + $0x8] sm:$0xff] %vm89, %v309
    %v312 = vld [vmem:[#allocation4] sm:$0xff]
    %v313 = vld [vmem:[#allocation4 + $0x8] sm:$0xff]
    %v314 = vld [vmem:[%s63] sm:$0xff]
    %v315 = vld [vmem:[%s63 + $0x8] sm:$0xff]
    %v316 = vld [vmem:[%s63 + $0x10] sm:$0xff]
    %v317 = vld [vmem:[%s63 + $0x18] sm:$0xff]
    %v318 = vld [vmem:[%s63 + $0x20] sm:$0xff]
    %v319 = vld [vmem:[%s63 + $0x28] sm:$0xff]
    %v320 = vld [vmem:[%s63 + $0x30] sm:$0xff]
    %v321 = vld [vmem:[%s63 + $0x38] sm:$0xff]
    %v323 = vsel %vm89, %v314, 0
    %v326 = vsel %vm89, %v315, 0
    %v329 = vsel %vm89, %v316, 0
    %v332 = vsel %vm89, %v317, 0
    %v335 = vsel %vm89, %v318, 0
    %v338 = vsel %vm89, %v319, 0
    %v341 = vsel %vm89, %v320, 0
    %v344 = vsel %vm89, %v321, 0
    %346 = vmatprep.subr.mxu0 0.0
    %347 = vmatpush1.xpose.msra.mxu0 0.0
    %348 = vmatprep.subr.mxu0 0.0
    %349 = vmatpush1.xpose.msra.mxu0 0.0
    %350 = vmatprep.subr.mxu0 0.0
    %351 = vmatpush1.xpose.msra.mxu0 0.0
    %352 = vmatprep.subr.mxu0 0.0
    %353 = vmatpush1.xpose.msra.mxu0 0.0
    %354 = vmatprep.subr.mxu0 0.0
    %355 = vmatpush1.xpose.msra.mxu0 0.0
    %356 = vmatprep.subr.mxu0 0.0
    %357 = vmatpush1.xpose.msra.mxu0 0.0
    %358 = vmatprep.subr.mxu0 0.0
    %359 = vmatpush1.xpose.msra.mxu0 0.0
    %360 = vmatprep.subr.mxu0 0.0
    %361 = vmatpush1.xpose.msra.mxu0 0.0
    %362 = vmatprep.subr.mxu0 0.0
    %363 = vmatpush1.xpose.msra.mxu0 %v344
    %364 = vmatprep.subr.mxu0 0.0
    %365 = vmatpush1.xpose.msra.mxu0 %v341
    %366 = vmatprep.subr.mxu0 0.0
    %367 = vmatpush1.xpose.msra.mxu0 %v338
    %368 = vmatprep.subr.mxu0 0.0
    %369 = vmatpush1.xpose.msra.mxu0 %v335
    %370 = vmatprep.subr.mxu0 0.0
    %371 = vmatpush1.xpose.msra.mxu0 %v332
    %372 = vmatprep.subr.mxu0 0.0
    %373 = vmatpush1.xpose.msra.mxu0 %v329
    %374 = vmatprep.subr.mxu0 0.0
    %375 = vmatpush1.xpose.msra.mxu0 %v326
    %376 = vmatprep.subr.mxu0 0.0
    %377 = vmatpush1.xpose.msra.mxu0 %v323
    %378 = vmatprep.subr.mxu0 0.0
    %379 = vmatpush2.xpose.msra.mxu0 0.0
    %380 = vmatprep.subr.mxu0 0.0
    %381 = vmatpush2.xpose.msra.mxu0 0.0
    %382 = vmatprep.subr.mxu0 0.0
    %383 = vmatpush2.xpose.msra.mxu0 0.0
    %384 = vmatprep.subr.mxu0 0.0
    %385 = vmatpush2.xpose.msra.mxu0 0.0
    %386 = vmatprep.subr.mxu0 0.0
    %387 = vmatpush2.xpose.msra.mxu0 0.0
    %388 = vmatprep.subr.mxu0 0.0
    %389 = vmatpush2.xpose.msra.mxu0 0.0
    %390 = vmatprep.subr.mxu0 0.0
    %391 = vmatpush2.xpose.msra.mxu0 0.0
    %392 = vmatprep.subr.mxu0 0.0
    %393 = vmatpush2.xpose.msra.mxu0 0.0
    %394 = vmatprep.subr.mxu0 0.0
    %395 = vmatpush2.xpose.msra.mxu0 0.0
    %396 = vmatprep.subr.mxu0 0.0
    %397 = vmatpush2.xpose.msra.mxu0 0.0
    %398 = vmatprep.subr.mxu0 0.0
    %399 = vmatpush2.xpose.msra.mxu0 0.0
    %400 = vmatprep.subr.mxu0 0.0
    %401 = vmatpush2.xpose.msra.mxu0 0.0
    %402 = vmatprep.subr.mxu0 0.0
    %403 = vmatpush2.xpose.msra.mxu0 0.0
    %404 = vmatprep.subr.mxu0 0.0
    %405 = vmatpush2.xpose.msra.mxu0 0.0
    %406 = vmatprep.subr.mxu0 0.0
    %407 = vmatpush2.xpose.msra.mxu0 0.0
    %408 = vmatprep.subr.mxu0 0.0
    %409 = vmatpush2.xpose.msra.mxu0 0.0
    %410 = vmatprep.mubr.f32.mxu0 0.0
    %411 = vmatmul.mubr.f32.gmra.mxu0 %v91
    %v412 = vpop.f32.mrf.mxu0
    %v413 = vadd.f32 0.0, %v412
    %v414 = vpop.f32.mrf.mxu0
    %415 = vmatprep.mubr.f32.mxu0 0.0
    %416 = vmatmul.mubr.f32.gmra.mxu0 %v94
    %v417 = vpop.f32.mrf.mxu0
    %v418 = vadd.f32 0.0, %v417
    %v419 = vpop.f32.mrf.mxu0
    %420 = vdwg.mxu0
    %v421 = vadd.f32 %v312, %v413
    %v422 = vadd.f32 %v313, %v418
    %423 = vst.msk [vmem:[#allocation4] sm:$0xff] %vm89, %v421
    %424 = vst.msk [vmem:[#allocation4 + $0x8] sm:$0xff] %vm89, %v422
    // Predicated region
    $region22: #{tpu_custom_call.1} parent=1 // pred_check
      %p425 = pneg %p66
    $region23: #{tpu_custom_call.1} parent=1 // pred_check_branch
      %427 = sbr.rel (%p425) target = $region25
    $region24: #{tpu_custom_call.1} parent=1 // pred_region
      %v428 = vld [vmem:[#allocation2] sm:$0xff]
      %v429 = vld [vmem:[#allocation2 + $0x8] sm:$0xff]
      %430 = vst.msk [vmem:[#allocation5] sm:$0xff] %vm89, %v428
      %431 = vst.msk [vmem:[#allocation5 + $0x8] sm:$0xff] %vm89, %v429
      %v432 = vld [vmem:[#allocation3] sm:$0xff]
      %v433 = vld [vmem:[#allocation3 + $0x8] sm:$0xff]
      %434 = vst.msk [vmem:[#allocation7] sm:$0xff] %vm89, %v432
      %435 = vst.msk [vmem:[#allocation7 + $0x8] sm:$0xff] %vm89, %v433
      %v436 = vld [vmem:[#allocation4] sm:$0xff]
      %v437 = vld [vmem:[#allocation4 + $0x8] sm:$0xff]
      %438 = vst.msk [vmem:[#allocation9] sm:$0xff] %vm89, %v436
      %439 = vst.msk [vmem:[#allocation9 + $0x8] sm:$0xff] %vm89, %v437
    $region25: #{tpu_custom_call.1} parent=1 // pred_fallthru
      _
    // Predicated region
    $region26: #{tpu_custom_call.1} parent=1 // pred_check
      _
    $region27: #{tpu_custom_call.1} parent=1 // pred_check_branch
      %441 = sbr.rel (0) target = $region29
    $region28: #{tpu_custom_call.1} parent=1 // pred_region
      %s443 = ssub.s32 256, 256
      %444 = vsyncadd [#allocation6], %s443
      %s445 = sshll.u32 [#allocation5], 4
      %s446 = int_to_ptr.vmem [resolvable:$true] %s445
      %451 = dma.vmem_to_hbm [thread:$0]  %s446, 256, %s4, [#allocation6], 128, 128, 8
    $region29: #{tpu_custom_call.1} parent=1 // pred_fallthru
      _
    // Predicated region
    $region30: #{tpu_custom_call.1} parent=1 // pred_check
      _
    $region31: #{tpu_custom_call.1} parent=1 // pred_check_branch
      %453 = sbr.rel (0) target = $region33
    $region32: #{tpu_custom_call.1} parent=1 // pred_region
      %s455 = ssub.s32 256, 256
      %456 = vsyncadd [#allocation8], %s455
      %s457 = sshll.u32 [#allocation7], 4
      %s458 = int_to_ptr.vmem [resolvable:$true] %s457
      %463 = dma.vmem_to_hbm [thread:$0]  %s458, 256, %s5, [#allocation8], 128, 128, 8
    $region33: #{tpu_custom_call.1} parent=1 // pred_fallthru
      _
    // Predicated region
    $region34: #{tpu_custom_call.1} parent=1 // pred_check
      _
    $region35: #{tpu_custom_call.1} parent=1 // pred_check_branch
      %465 = sbr.rel (0) target = $region37
    $region36: #{tpu_custom_call.1} parent=1 // pred_region
      %s467 = ssub.s32 256, 256
      %468 = vsyncadd [#allocation8], %s467
      %s469 = sshll.u32 [#allocation9], 4
      %s470 = int_to_ptr.vmem [resolvable:$true] %s469
      %475 = dma.vmem_to_hbm [thread:$0]  %s470, 256, %s6, [#allocation8], 128, 128, 8
    $region37: #{tpu_custom_call.1} parent=1 // pred_fallthru
      _
    // Predicated region
    $region38: #{tpu_custom_call.1} parent=1 // pred_check
      _
    $region39: #{tpu_custom_call.1} parent=1 // pred_check_branch
      %477 = sbr.rel (0) target = $region41
    $region40: #{tpu_custom_call.1} parent=1 // pred_region
      %478 = dma.done [#allocation6], 256
    $region41: #{tpu_custom_call.1} parent=1 // pred_fallthru
      _
    // Predicated region
    $region42: #{tpu_custom_call.1} parent=1 // pred_check
      _
    $region43: #{tpu_custom_call.1} parent=1 // pred_check_branch
      %480 = sbr.rel (0) target = $region45
    $region44: #{tpu_custom_call.1} parent=1 // pred_region
      %481 = dma.done [#allocation8], 256
    $region45: #{tpu_custom_call.1} parent=1 // pred_fallthru
      _
    // Predicated region
    $region46: #{tpu_custom_call.1} parent=1 // pred_check
      _
    $region47: #{tpu_custom_call.1} parent=1 // pred_check_branch
      %483 = sbr.rel (0) target = $region49
    $region48: #{tpu_custom_call.1} parent=1 // pred_region
      %484 = dma.done [#allocation8], 256
    $region49: #{tpu_custom_call.1} parent=1 // pred_fallthru
      _
    %485 = vsyncpa [#allocation6], 1
    %486 = vsyncpa [#allocation8], 1

</llo_original>
